<compile_context>
chip_gen: v6e
topology: v6e:2x2x1
jax: 0.10.0
libtpu: 0.0.40
codegen_flags: <defaults>
</compile_context>

<pallas_src>
import jax
import jax.numpy as jnp
import numpy as np
from jax.experimental import pallas as pl
from jax.experimental.pallas import tpu as pltpu


def _make_decoder_kernel(n_hidden: int):
    """Fused decoder kernel for a fixed number of hidden (Linear+BN+ReLU) layers."""

    def kernel(*refs):
        # refs = [x, w0, b0, ..., w_{H-1}, b_{H-1}, w_diff, b_diff, g_diff,
        #         scatter_pad, out]
        x_ref = refs[0]
        wb_refs = refs[1 : 1 + 2 * n_hidden]
        wd_ref = refs[1 + 2 * n_hidden]
        bd_ref = refs[2 + 2 * n_hidden]
        g_ref = refs[3 + 2 * n_hidden]
        m_ref = refs[4 + 2 * n_hidden]
        out_ref = refs[5 + 2 * n_hidden]

        h = x_ref[...].astype(jnp.float32)          # (B, latent_dim)

        # Hidden layers: Linear -> BatchNorm1d (one-pass batch stats) -> ReLU.
        for i in range(n_hidden):
            w = wb_refs[2 * i][...]
            b = wb_refs[2 * i + 1][...]              # (1, hidden)
            h = jnp.dot(h, w, preferred_element_type=jnp.float32) + b
            mean = jnp.mean(h, axis=0, keepdims=True)
            msq = jnp.mean(h * h, axis=0, keepdims=True)
            var = msq - mean * mean                  # biased variance, one pass
            h = (h - mean) * jax.lax.rsqrt(var + 1e-5)
            h = jnp.maximum(h, 0.0)

        # Final Linear folded to the channel-difference form + Gumbel diff.
        # x_edge[e] = 1.0 iff (logit0 - logit1) + (g0 - g1) >= 0  (hard GS, ch 0).
        d = (jnp.dot(h, wd_ref[...], preferred_element_type=jnp.float32)
             + bd_ref[...] + g_ref[...])             # (B, E)
        x_edge = (d >= 0.0).astype(jnp.float32)

        # Symmetric adjacency via one matmul against the padded 0/1 scatter
        # matrix M (E, 128): M[e, i*N+j] = M[e, j*N+i] = 1 -> adj + adj.T,
        # diagonal untouched.  Output is 128 lanes wide -> unmasked stores.
        out_ref[...] = jnp.dot(x_edge, m_ref[...], preferred_element_type=jnp.float32)

    return kernel


def _full_spec(arr):
    """Whole array resident every grid step (shared weights)."""
    nd = arr.ndim
    return pl.BlockSpec(arr.shape, lambda g, nd=nd: (0,) * nd)


def _group_spec(arr):
    """Leading axis is the grid (group) axis; squeeze it in the kernel."""
    trailing = arr.shape[1:]
    nt = len(trailing)
    return pl.BlockSpec((None,) + trailing, lambda g, nt=nt: (g,) + (0,) * nt)


def decoder_forward(x, weights, biases, w_diff, b_diff, g_diff, scatter_pad, n_nodes):
    """x: (G, B, latent_dim). Returns adjacency (G, B, n_nodes, n_nodes)."""
    G, B, _ = x.shape
    n_hidden = len(weights)
    npad = scatter_pad.shape[1]

    operands = [x]
    in_specs = [_group_spec(x)]
    for w, b in zip(weights, biases):
        operands += [w, b]
        in_specs += [_full_spec(w), _full_spec(b)]
    operands += [w_diff, b_diff, g_diff, scatter_pad]
    in_specs += [_full_spec(w_diff), _full_spec(b_diff),
                 _group_spec(g_diff), _full_spec(scatter_pad)]

    out_padded = pl.pallas_call(
        _make_decoder_kernel(n_hidden),
        out_shape=jax.ShapeDtypeStruct((G, B, npad), jnp.float32),
        grid=(G,),
        in_specs=in_specs,
        out_specs=pl.BlockSpec((None, B, npad),
                               lambda g: (g, 0, 0)),
        compiler_params=pltpu.CompilerParams(
            dimension_semantics=("parallel",)),
    )(*operands)

    nn2 = n_nodes * n_nodes
    return out_padded[:, :, :nn2].reshape(G, B, n_nodes, n_nodes)


def build_params(key, latent_dim, hidden_dim, n_layers, n_nodes):
    """Synthetic parameters with the PyTorch module's shapes; last layer folded
    into its channel-difference form for the 2-class hard Gumbel-softmax."""
    n_edges = n_nodes * (n_nodes - 1) // 2
    dims = [latent_dim] + [hidden_dim] * (n_layers - 1) + [2 * n_edges]

    weights, biases = [], []
    for i in range(n_layers):
        key, kw, kb = jax.random.split(key, 3)
        bound = 1.0 / np.sqrt(dims[i])
        w = jax.random.uniform(kw, (dims[i], dims[i + 1]), jnp.float32, -bound, bound)
        b = jax.random.uniform(kb, (1, dims[i + 1]), jnp.float32, -bound, bound)
        weights.append(w)
        biases.append(b)

    # Fold the interleaved (ch0, ch1) last layer into a difference layer.
    w_last, b_last = weights[-1], biases[-1]
    w_diff = w_last[:, 0::2] - w_last[:, 1::2]          # (hidden, E)
    b_diff = b_last[:, 0::2] - b_last[:, 1::2]          # (1, E)
    hidden_weights, hidden_biases = weights[:-1], biases[:-1]

    # Padded triu scatter matrix (E, NPAD): both (i,j) and (j,i) set -> adj+adj.T.
    npad = max(128, ((n_nodes * n_nodes + 127) // 128) * 128)
    iu, ju = np.triu_indices(n_nodes, k=1)
    scatter = np.zeros((n_edges, npad), dtype=np.float32)
    scatter[np.arange(n_edges), iu * n_nodes + ju] = 1.0
    scatter[np.arange(n_edges), ju * n_nodes + iu] = 1.0
    scatter_pad = jnp.asarray(scatter)

    return key, hidden_weights, hidden_biases, w_diff, b_diff, scatter_pad


if __name__ == "__main__":
    # Small shapes consistent with the Decoder; G independent decoder calls are
    # batched into one pallas_call (each group keeps its own BatchNorm stats).
    groups = 2          # grid axis, "parallel" (v7x: split across 2 TCs)
    batch = 8           # sublane-aligned logical batch, no padded rows
    latent_dim = 16     # stands in for latent + text embedding concat
    hidden_dim = 32
    n_layers = 3
    n_nodes = 8
    n_edges = n_nodes * (n_nodes - 1) // 2

    # TODO(synk): the GIN encoder (message passing over a dynamic edge_index)
    # and the reparameterization sampling are left outside the kernel; only the
    # Decoder forward is fused here.

    key = jax.random.PRNGKey(0)
    key, weights, biases, w_diff, b_diff, scatter_pad = build_params(
        key, latent_dim, hidden_dim, n_layers, n_nodes
    )

    key, kx, kg = jax.random.split(key, 3)
    x = jax.random.normal(kx, (groups, batch, latent_dim), jnp.float32)

    # Gumbel noise for the (…, E, 2) logits; only the channel difference matters.
    g = jax.random.gumbel(kg, (groups, batch, n_edges, 2), jnp.float32)
    g_diff = g[..., 0] - g[..., 1]                      # (G, B, E)

    adj = decoder_forward(x, weights, biases, w_diff, b_diff, g_diff,
                          scatter_pad, n_nodes)
    adj = jax.block_until_ready(adj)

    # Sanity: shape, symmetry, zero diagonal, binary entries.
    assert adj.shape == (groups, batch, n_nodes, n_nodes)
    assert bool(jnp.all(adj == jnp.transpose(adj, (0, 1, 3, 2))))
    assert bool(jnp.all(jnp.diagonal(adj, axis1=2, axis2=3) == 0.0))
    assert bool(jnp.all((adj == 0.0) | (adj == 1.0)))

    print("KERNEL_OK")
</pallas_src>

<mosaic_0001>
module attributes {stable_mosaic.version = 11 : i64} {
  func.func @kernel(%arg0: i32, %arg1: memref<1x8x16xf32, #tpu.memory_space<vmem>>, %arg2: memref<16x32xf32, #tpu.memory_space<vmem>>, %arg3: memref<1x32xf32, #tpu.memory_space<vmem>>, %arg4: memref<32x32xf32, #tpu.memory_space<vmem>>, %arg5: memref<1x32xf32, #tpu.memory_space<vmem>>, %arg6: memref<32x28xf32, #tpu.memory_space<vmem>>, %arg7: memref<1x28xf32, #tpu.memory_space<vmem>>, %arg8: memref<1x8x28xf32, #tpu.memory_space<vmem>>, %arg9: memref<28x128xf32, #tpu.memory_space<vmem>>, %arg10: memref<1x8x128xf32, #tpu.memory_space<vmem>>) attributes {dimension_semantics = [#tpu.dimension_semantics<parallel>], iteration_bounds = array<i64: 2>, scalar_prefetch = 0 : i64, scratch_operands = 0 : i64, tpu.core_type = #tpu.core_type<tc>, window_params = [{transform_indices = @transform_0, window_bounds = array<i64: 1, 8, 16>}, {pipeline_mode = #tpu.pipeline_mode<synchronous>, transform_indices = @transform_1, window_bounds = array<i64: 16, 32>}, {pipeline_mode = #tpu.pipeline_mode<synchronous>, transform_indices = @transform_2, window_bounds = array<i64: 1, 32>}, {pipeline_mode = #tpu.pipeline_mode<synchronous>, transform_indices = @transform_3, window_bounds = array<i64: 32, 32>}, {pipeline_mode = #tpu.pipeline_mode<synchronous>, transform_indices = @transform_4, window_bounds = array<i64: 1, 32>}, {pipeline_mode = #tpu.pipeline_mode<synchronous>, transform_indices = @transform_5, window_bounds = array<i64: 32, 28>}, {pipeline_mode = #tpu.pipeline_mode<synchronous>, transform_indices = @transform_6, window_bounds = array<i64: 1, 28>}, {transform_indices = @transform_7, window_bounds = array<i64: 1, 8, 28>}, {pipeline_mode = #tpu.pipeline_mode<synchronous>, transform_indices = @transform_8, window_bounds = array<i64: 28, 128>}, {transform_indices = @transform_9, window_bounds = array<i64: 1, 8, 128>}]} {
    %c0 = arith.constant 0 : index
    %c0_0 = arith.constant 0 : index
    %c0_1 = arith.constant 0 : index
    %0 = vector.load %arg1[%c0, %c0_0, %c0_1] : memref<1x8x16xf32, #tpu.memory_space<vmem>>, vector<1x8x16xf32>
    %1 = vector.shape_cast %0 : vector<1x8x16xf32> to vector<8x16xf32>
    %c0_2 = arith.constant 0 : index
    %c0_3 = arith.constant 0 : index
    %2 = vector.load %arg2[%c0_2, %c0_3] : memref<16x32xf32, #tpu.memory_space<vmem>>, vector<16x32xf32>
    %c0_4 = arith.constant 0 : index
    %c0_5 = arith.constant 0 : index
    %3 = vector.load %arg3[%c0_4, %c0_5] : memref<1x32xf32, #tpu.memory_space<vmem>>, vector<1x32xf32>
    %cst = arith.constant dense<0.000000e+00> : vector<8x32xf32>
    %4 = tpu.matmul %1, %2, %cst {dimension_numbers = #tpu.dot_dimension_numbers<[1], [0], [0], [1], [0, 0, 1, 1], [], []>} : vector<8x16xf32>, vector<16x32xf32>, vector<8x32xf32> -> vector<8x32xf32>
    %5 = vector.broadcast %3 : vector<1x32xf32> to vector<8x32xf32>
    %6 = arith.addf %4, %5 : vector<8x32xf32>
    %cst_6 = arith.constant dense<0.000000e+00> : vector<32xf32>
    %7 = vector.multi_reduction <add>, %6, %cst_6 [0] : vector<8x32xf32> to vector<32xf32>
    %8 = vector.shape_cast %7 : vector<32xf32> to vector<1x32xf32>
    %cst_7 = arith.constant 8.000000e+00 : f32
    %9 = vector.broadcast %cst_7 : f32 to vector<1x32xf32>
    %10 = arith.divf %8, %9 : vector<1x32xf32>
    %11 = arith.mulf %6, %6 : vector<8x32xf32>
    %cst_8 = arith.constant dense<0.000000e+00> : vector<32xf32>
    %12 = vector.multi_reduction <add>, %11, %cst_8 [0] : vector<8x32xf32> to vector<32xf32>
    %13 = vector.shape_cast %12 : vector<32xf32> to vector<1x32xf32>
    %cst_9 = arith.constant 8.000000e+00 : f32
    %14 = vector.broadcast %cst_9 : f32 to vector<1x32xf32>
    %15 = arith.divf %13, %14 : vector<1x32xf32>
    %16 = arith.mulf %10, %10 : vector<1x32xf32>
    %17 = arith.subf %15, %16 : vector<1x32xf32>
    %18 = vector.broadcast %10 : vector<1x32xf32> to vector<8x32xf32>
    %19 = arith.subf %6, %18 : vector<8x32xf32>
    %cst_10 = arith.constant 9.99999974E-6 : f32
    %20 = vector.broadcast %cst_10 : f32 to vector<1x32xf32>
    %21 = arith.addf %17, %20 : vector<1x32xf32>
    %22 = math.rsqrt %21 : vector<1x32xf32>
    %23 = vector.broadcast %22 : vector<1x32xf32> to vector<8x32xf32>
    %24 = arith.mulf %19, %23 : vector<8x32xf32>
    %cst_11 = arith.constant 0.000000e+00 : f32
    %25 = vector.broadcast %cst_11 : f32 to vector<8x32xf32>
    %26 = arith.maximumf %24, %25 : vector<8x32xf32>
    %c0_12 = arith.constant 0 : index
    %c0_13 = arith.constant 0 : index
    %27 = vector.load %arg4[%c0_12, %c0_13] : memref<32x32xf32, #tpu.memory_space<vmem>>, vector<32x32xf32>
    %c0_14 = arith.constant 0 : index
    %c0_15 = arith.constant 0 : index
    %28 = vector.load %arg5[%c0_14, %c0_15] : memref<1x32xf32, #tpu.memory_space<vmem>>, vector<1x32xf32>
    %cst_16 = arith.constant dense<0.000000e+00> : vector<8x32xf32>
    %29 = tpu.matmul %26, %27, %cst_16 {dimension_numbers = #tpu.dot_dimension_numbers<[1], [0], [0], [1], [0, 0, 1, 1], [], []>} : vector<8x32xf32>, vector<32x32xf32>, vector<8x32xf32> -> vector<8x32xf32>
    %30 = vector.broadcast %28 : vector<1x32xf32> to vector<8x32xf32>
    %31 = arith.addf %29, %30 : vector<8x32xf32>
    %cst_17 = arith.constant dense<0.000000e+00> : vector<32xf32>
    %32 = vector.multi_reduction <add>, %31, %cst_17 [0] : vector<8x32xf32> to vector<32xf32>
    %33 = vector.shape_cast %32 : vector<32xf32> to vector<1x32xf32>
    %cst_18 = arith.constant 8.000000e+00 : f32
    %34 = vector.broadcast %cst_18 : f32 to vector<1x32xf32>
    %35 = arith.divf %33, %34 : vector<1x32xf32>
    %36 = arith.mulf %31, %31 : vector<8x32xf32>
    %cst_19 = arith.constant dense<0.000000e+00> : vector<32xf32>
    %37 = vector.multi_reduction <add>, %36, %cst_19 [0] : vector<8x32xf32> to vector<32xf32>
    %38 = vector.shape_cast %37 : vector<32xf32> to vector<1x32xf32>
    %cst_20 = arith.constant 8.000000e+00 : f32
    %39 = vector.broadcast %cst_20 : f32 to vector<1x32xf32>
    %40 = arith.divf %38, %39 : vector<1x32xf32>
    %41 = arith.mulf %35, %35 : vector<1x32xf32>
    %42 = arith.subf %40, %41 : vector<1x32xf32>
    %43 = vector.broadcast %35 : vector<1x32xf32> to vector<8x32xf32>
    %44 = arith.subf %31, %43 : vector<8x32xf32>
    %cst_21 = arith.constant 9.99999974E-6 : f32
    %45 = vector.broadcast %cst_21 : f32 to vector<1x32xf32>
    %46 = arith.addf %42, %45 : vector<1x32xf32>
    %47 = math.rsqrt %46 : vector<1x32xf32>
    %48 = vector.broadcast %47 : vector<1x32xf32> to vector<8x32xf32>
    %49 = arith.mulf %44, %48 : vector<8x32xf32>
    %cst_22 = arith.constant 0.000000e+00 : f32
    %50 = vector.broadcast %cst_22 : f32 to vector<8x32xf32>
    %51 = arith.maximumf %49, %50 : vector<8x32xf32>
    %c0_23 = arith.constant 0 : index
    %c0_24 = arith.constant 0 : index
    %52 = vector.load %arg6[%c0_23, %c0_24] : memref<32x28xf32, #tpu.memory_space<vmem>>, vector<32x28xf32>
    %cst_25 = arith.constant dense<0.000000e+00> : vector<8x28xf32>
    %53 = tpu.matmul %51, %52, %cst_25 {dimension_numbers = #tpu.dot_dimension_numbers<[1], [0], [0], [1], [0, 0, 1, 1], [], []>} : vector<8x32xf32>, vector<32x28xf32>, vector<8x28xf32> -> vector<8x28xf32>
    %c0_26 = arith.constant 0 : index
    %c0_27 = arith.constant 0 : index
    %54 = vector.load %arg7[%c0_26, %c0_27] : memref<1x28xf32, #tpu.memory_space<vmem>>, vector<1x28xf32>
    %55 = vector.broadcast %54 : vector<1x28xf32> to vector<8x28xf32>
    %56 = arith.addf %53, %55 : vector<8x28xf32>
    %c0_28 = arith.constant 0 : index
    %c0_29 = arith.constant 0 : index
    %c0_30 = arith.constant 0 : index
    %57 = vector.load %arg8[%c0_28, %c0_29, %c0_30] : memref<1x8x28xf32, #tpu.memory_space<vmem>>, vector<1x8x28xf32>
    %58 = vector.shape_cast %57 : vector<1x8x28xf32> to vector<8x28xf32>
    %59 = arith.addf %56, %58 : vector<8x28xf32>
    %cst_31 = arith.constant 0.000000e+00 : f32
    %60 = vector.broadcast %cst_31 : f32 to vector<8x28xf32>
    %61 = arith.cmpf oge, %59, %60 : vector<8x28xf32>
    %62 = arith.extui %61 : vector<8x28xi1> to vector<8x28xi32>
    %63 = arith.sitofp %62 : vector<8x28xi32> to vector<8x28xf32>
    %c0_32 = arith.constant 0 : index
    %c0_33 = arith.constant 0 : index
    %64 = vector.load %arg9[%c0_32, %c0_33] : memref<28x128xf32, #tpu.memory_space<vmem>>, vector<28x128xf32>
    %cst_34 = arith.constant dense<0.000000e+00> : vector<8x128xf32>
    %65 = tpu.matmul %63, %64, %cst_34 {dimension_numbers = #tpu.dot_dimension_numbers<[1], [0], [0], [1], [0, 0, 1, 1], [], []>} : vector<8x28xf32>, vector<28x128xf32>, vector<8x128xf32> -> vector<8x128xf32>
    %c0_35 = arith.constant 0 : index
    %c0_36 = arith.constant 0 : index
    %c0_37 = arith.constant 0 : index
    %66 = vector.load %arg10[%c0_35, %c0_36, %c0_37] : memref<1x8x128xf32, #tpu.memory_space<vmem>>, vector<1x8x128xf32>
    %67 = vector.shape_cast %66 : vector<1x8x128xf32> to vector<8x128xf32>
    %68 = vector.shape_cast %65 : vector<8x128xf32> to vector<1x8x128xf32>
    tpu.vector_store %arg10[%c0_35, %c0_36, %c0_37], %68 {strides = array<i32>} : memref<1x8x128xf32, #tpu.memory_space<vmem>>, vector<1x8x128xf32>,
    return
  }
  func.func @transform_0(%arg0: i32) -> (i32, i32, i32) {
    %c0_i32 = arith.constant 0 : i32
    %c0_i32_0 = arith.constant 0 : i32
    %c0_i32_1 = arith.constant 0 : i32
    return %arg0, %c0_i32, %c0_i32_0 : i32, i32, i32
  }
  func.func @transform_1(%arg0: i32) -> (i32, i32) {
    %c0_i32 = arith.constant 0 : i32
    %c0_i32_0 = arith.constant 0 : i32
    %c0_i32_1 = arith.constant 0 : i32
    return %c0_i32, %c0_i32_0 : i32, i32
  }
  func.func @transform_2(%arg0: i32) -> (i32, i32) {
    %c0_i32 = arith.constant 0 : i32
    %c0_i32_0 = arith.constant 0 : i32
    %c0_i32_1 = arith.constant 0 : i32
    return %c0_i32, %c0_i32_0 : i32, i32
  }
  func.func @transform_3(%arg0: i32) -> (i32, i32) {
    %c0_i32 = arith.constant 0 : i32
    %c0_i32_0 = arith.constant 0 : i32
    %c0_i32_1 = arith.constant 0 : i32
    return %c0_i32, %c0_i32_0 : i32, i32
  }
  func.func @transform_4(%arg0: i32) -> (i32, i32) {
    %c0_i32 = arith.constant 0 : i32
    %c0_i32_0 = arith.constant 0 : i32
    %c0_i32_1 = arith.constant 0 : i32
    return %c0_i32, %c0_i32_0 : i32, i32
  }
  func.func @transform_5(%arg0: i32) -> (i32, i32) {
    %c0_i32 = arith.constant 0 : i32
    %c0_i32_0 = arith.constant 0 : i32
    %c0_i32_1 = arith.constant 0 : i32
    return %c0_i32, %c0_i32_0 : i32, i32
  }
  func.func @transform_6(%arg0: i32) -> (i32, i32) {
    %c0_i32 = arith.constant 0 : i32
    %c0_i32_0 = arith.constant 0 : i32
    %c0_i32_1 = arith.constant 0 : i32
    return %c0_i32, %c0_i32_0 : i32, i32
  }
  func.func @transform_7(%arg0: i32) -> (i32, i32, i32) {
    %c0_i32 = arith.constant 0 : i32
    %c0_i32_0 = arith.constant 0 : i32
    %c0_i32_1 = arith.constant 0 : i32
    return %arg0, %c0_i32, %c0_i32_0 : i32, i32, i32
  }
  func.func @transform_8(%arg0: i32) -> (i32, i32) {
    %c0_i32 = arith.constant 0 : i32
    %c0_i32_0 = arith.constant 0 : i32
    %c0_i32_1 = arith.constant 0 : i32
    return %c0_i32, %c0_i32_0 : i32, i32
  }
  func.func @transform_9(%arg0: i32) -> (i32, i32, i32) {
    %c0_i32 = arith.constant 0 : i32
    %c0_i32_0 = arith.constant 0 : i32
    %c0_i32_1 = arith.constant 0 : i32
    return %arg0, %c0_i32, %c0_i32_0 : i32, i32, i32
  }
}

</mosaic_0001>

<llo_original>
// kernel: tpu_custom_call.1
$region0: #{tpu_custom_call.1}
  #allocation0 [shape = 'u32[]', space=smem, size = 0x4, offset = 0x4, fixed_abs, tag = 'smem constant byte address 0x4 - core index']
  #allocation1 [shape = 'u32[144,128]{1,0:T(1,128)}', space=vmem, size = 0x12000, scoped, tag = 'internal scratch']
  %s0 = inlined_call_operand.hbm [shape: f32[2,8,16], index: 0, kind: input, shape index: {}]
  %s1 = inlined_call_operand.hbm [shape: f32[16,32], index: 1, kind: input, shape index: {}]
  %s2 = inlined_call_operand.vmem [shape: f32[1,32], index: 2, kind: input, shape index: {}]
  %s3 = inlined_call_operand.hbm [shape: f32[32,32], index: 3, kind: input, shape index: {}]
  %s4 = inlined_call_operand.vmem [shape: f32[1,32], index: 4, kind: input, shape index: {}]
  %s5 = inlined_call_operand.hbm [shape: f32[32,28], index: 5, kind: input, shape index: {}]
  %s6 = inlined_call_operand.vmem [shape: f32[1,28], index: 6, kind: input, shape index: {}]
  %s7 = inlined_call_operand.hbm [shape: f32[2,8,28], index: 7, kind: input, shape index: {}]
  %s8 = inlined_call_operand.hbm [shape: f32[28,128], index: 8, kind: input, shape index: {}]
  %s9 = inlined_call_operand.hbm [shape: f32[2,8,128], index: 9, kind: output, shape index: {}]
  %s10 = sld [smem:[#allocation0]]
  $region93: #{tpu_custom_call.1} parent=0
    _
  %s12 = ssub.s32 1, %s10
  %s13 = scalar_select 0, %s12, %s10
  $region1: #{tpu_custom_call.1} parent=0
    #allocation2 [shape = 'u8[8192]{0}', space=vmem, size = 0x2000, scoped, tag = 'input window, operand 0']
    #allocation3 [shape = 's32[2]{0}', space=sflag, size = 0x8, scoped, tag = 'scoped memory for tpu_custom_call.1']
    #allocation4 [shape = 's32[2]{0}', space=sflag, size = 0x8, scoped, tag = 'scoped memory for tpu_custom_call.1']
    #allocation5 [shape = 'u8[8192]{0}', space=vmem, size = 0x2000, scoped, tag = 'input window, operand 1, single buffered']
    #allocation6 [shape = 's32[1]{0}', space=sflag, size = 0x4, scoped, tag = 'scoped memory for tpu_custom_call.1']
    #allocation7 [shape = 'u8[16384]{0}', space=vmem, size = 0x4000, scoped, tag = 'input window, operand 3, single buffered']
    #allocation8 [shape = 'u8[16384]{0}', space=vmem, size = 0x4000, scoped, tag = 'input window, operand 5, single buffered']
    #allocation9 [shape = 's32[1]{0}', space=sflag, size = 0x4, scoped, tag = 'scoped memory for tpu_custom_call.1']
    #allocation10 [shape = 'u8[8192]{0}', space=vmem, size = 0x2000, scoped, tag = 'input window, operand 7']
    #allocation11 [shape = 'u8[16384]{0}', space=vmem, size = 0x4000, scoped, tag = 'input window, operand 8, single buffered']
    #allocation12 [shape = 'u8[8192]{0}', space=vmem, size = 0x2000, scoped, tag = 'output window, operand 0']
    %14 = vsyncpa [#allocation3], 0
    %s15 = scalar_lea.sflag [#allocation3], 1
    %16 = vsyncpa %s15, 0
    %17 = vsyncpa [#allocation6], 0
    %18 = vsyncpa [#allocation9], 0
    %19 = vsyncpa [#allocation4], 0
    %s20 = scalar_lea.sflag [#allocation4], 1
    %21 = vsyncpa %s20, 0
    loop: start=0, step=1, limit=4
    $region2: #{tpu_custom_call.1} parent=1 // loop_pre_header
      _
    $region3: #{tpu_custom_call.1} parent=1 // loop_header
      %s23 = sphi 0, %s27
      %p24 = scmp.ge.s32.totalorder %s23, 4
      %s33 = sphi 0, %s35
      %s36 = sphi 0, %s33
      %s37 = sphi 0, %s36
      %s53 = sphi 0, %s37
      %s57 = sphi 0, %s57
      %s59 = sphi 0, %s57
      %s60 = sphi 0, %s59
      %s74 = sphi 0, %s60
      %s78 = sphi 0, %s78
      %s80 = sphi 0, %s78
      %s81 = sphi 0, %s80
      %s95 = sphi 0, %s81
      %s99 = sphi 0, %s99
      %s101 = sphi 0, %s99
      %s102 = sphi 0, %s101
      %s116 = sphi 0, %s102
      %s120 = sphi 0, %s120
      %s122 = sphi 0, %s120
      %s123 = sphi 0, %s122
      %s137 = sphi 0, %s123
      %s141 = sphi 0, %s141
      %s143 = sphi 0, %s141
      %s144 = sphi 0, %s143
      %s158 = sphi 0, %s144
      %s162 = sphi 0, %s162
      %s164 = sphi 0, %s162
      %s165 = sphi 0, %s164
      %s179 = sphi 0, %s165
      %s185 = sphi 0, %s187
      %s188 = sphi 0, %s185
      %s189 = sphi 0, %s188
      %s205 = sphi 0, %s189
      %s209 = sphi 0, %s209
      %s211 = sphi 0, %s209
      %s212 = sphi 0, %s211
      %s226 = sphi 0, %s212
      %s232 = sphi 0, %s234
      %s235 = sphi 0, %s232
      %s236 = sphi 0, %s235
      %s252 = sphi 0, %s236
    $region4: #{tpu_custom_call.1} parent=1 // loop_header_branch
      %26 = sbr.rel (%p24) target = $region8
    $region5: #{tpu_custom_call.1} parent=1 // loop_body
      %s28 = ssub.s32 %s23, 1
      %s29 = ssub.s32 %s23, 2
      %s30 = sadd.s32 %s23, 1
      %s31 = ssub.s32 %s23, %s30
      %p32 = scmp.eq.s32.totalorder %s31, 0
      %s34 = sadd.s32 %s33, 1
      %s35 = scalar_select %p32, %s33, %s34
      %p38 = pneg %p32
      %p39 = scmp.eq.s32.totalorder %s23, 1
      %p40 = por %p38, %p39
      %p41 = scmp.ne.s32.totalorder %s33, %s36
      %p42 = scmp.eq.s32.totalorder %s23, 0
      %p43 = por %p41, %p42
      %p44 = scmp.ne.s32.totalorder %s33, %s36
      %p45 = scmp.eq.s32.totalorder %s28, 1
      %p46 = por %p44, %p45
      %p47 = scmp.ne.s32.totalorder %s36, %s37
      %p48 = scmp.eq.s32.totalorder %s28, 0
      %p49 = por %p47, %p48
      %p50 = scmp.ne.s32.totalorder %s36, %s37
      %p51 = scmp.eq.s32.totalorder %s29, 1
      %p52 = por %p50, %p51
      %p54 = scmp.ne.s32.totalorder %s37, %s53
      %p55 = scmp.eq.s32.totalorder %s29, 0
      %p56 = por %p54, %p55
      %s58 = sadd.s32 %s57, 1
      %p61 = scmp.eq.s32.totalorder %s23, 1
      %p62 = scmp.ne.s32.totalorder %s57, %s59
      %p63 = scmp.eq.s32.totalorder %s23, 0
      %p64 = por %p62, %p63
      %p65 = scmp.ne.s32.totalorder %s57, %s59
      %p66 = scmp.eq.s32.totalorder %s28, 1
      %p67 = por %p65, %p66
      %p68 = scmp.ne.s32.totalorder %s59, %s60
      %p69 = scmp.eq.s32.totalorder %s28, 0
      %p70 = por %p68, %p69
      %p71 = scmp.ne.s32.totalorder %s59, %s60
      %p72 = scmp.eq.s32.totalorder %s29, 1
      %p73 = por %p71, %p72
      %p75 = scmp.ne.s32.totalorder %s60, %s74
      %p76 = scmp.eq.s32.totalorder %s29, 0
      %p77 = por %p75, %p76
      %s79 = sadd.s32 %s78, 1
      %p82 = scmp.eq.s32.totalorder %s23, 1
      %p83 = scmp.ne.s32.totalorder %s78, %s80
      %p84 = scmp.eq.s32.totalorder %s23, 0
      %p85 = por %p83, %p84
      %p86 = scmp.ne.s32.totalorder %s78, %s80
      %p87 = scmp.eq.s32.totalorder %s28, 1
      %p88 = por %p86, %p87
      %p89 = scmp.ne.s32.totalorder %s80, %s81
      %p90 = scmp.eq.s32.totalorder %s28, 0
      %p91 = por %p89, %p90
      %p92 = scmp.ne.s32.totalorder %s80, %s81
      %p93 = scmp.eq.s32.totalorder %s29, 1
      %p94 = por %p92, %p93
      %p96 = scmp.ne.s32.totalorder %s81, %s95
      %p97 = scmp.eq.s32.totalorder %s29, 0
      %p98 = por %p96, %p97
      %s100 = sadd.s32 %s99, 1
      %p103 = scmp.eq.s32.totalorder %s23, 1
      %p104 = scmp.ne.s32.totalorder %s99, %s101
      %p105 = scmp.eq.s32.totalorder %s23, 0
      %p106 = por %p104, %p105
      %p107 = scmp.ne.s32.totalorder %s99, %s101
      %p108 = scmp.eq.s32.totalorder %s28, 1
      %p109 = por %p107, %p108
      %p110 = scmp.ne.s32.totalorder %s101, %s102
      %p111 = scmp.eq.s32.totalorder %s28, 0
      %p112 = por %p110, %p111
      %p113 = scmp.ne.s32.totalorder %s101, %s102
      %p114 = scmp.eq.s32.totalorder %s29, 1
      %p115 = por %p113, %p114
      %p117 = scmp.ne.s32.totalorder %s102, %s116
      %p118 = scmp.eq.s32.totalorder %s29, 0
      %p119 = por %p117, %p118
      %s121 = sadd.s32 %s120, 1
      %p124 = scmp.eq.s32.totalorder %s23, 1
      %p125 = scmp.ne.s32.totalorder %s120, %s122
      %p126 = scmp.eq.s32.totalorder %s23, 0
      %p127 = por %p125, %p126
      %p128 = scmp.ne.s32.totalorder %s120, %s122
      %p129 = scmp.eq.s32.totalorder %s28, 1
      %p130 = por %p128, %p129
      %p131 = scmp.ne.s32.totalorder %s122, %s123
      %p132 = scmp.eq.s32.totalorder %s28, 0
      %p133 = por %p131, %p132
      %p134 = scmp.ne.s32.totalorder %s122, %s123
      %p135 = scmp.eq.s32.totalorder %s29, 1
      %p136 = por %p134, %p135
      %p138 = scmp.ne.s32.totalorder %s123, %s137
      %p139 = scmp.eq.s32.totalorder %s29, 0
      %p140 = por %p138, %p139
      %s142 = sadd.s32 %s141, 1
      %p145 = scmp.eq.s32.totalorder %s23, 1
      %p146 = scmp.ne.s32.totalorder %s141, %s143
      %p147 = scmp.eq.s32.totalorder %s23, 0
      %p148 = por %p146, %p147
      %p149 = scmp.ne.s32.totalorder %s141, %s143
      %p150 = scmp.eq.s32.totalorder %s28, 1
      %p151 = por %p149, %p150
      %p152 = scmp.ne.s32.totalorder %s143, %s144
      %p153 = scmp.eq.s32.totalorder %s28, 0
      %p154 = por %p152, %p153
      %p155 = scmp.ne.s32.totalorder %s143, %s144
      %p156 = scmp.eq.s32.totalorder %s29, 1
      %p157 = por %p155, %p156
      %p159 = scmp.ne.s32.totalorder %s144, %s158
      %p160 = scmp.eq.s32.totalorder %s29, 0
      %p161 = por %p159, %p160
      %s163 = sadd.s32 %s162, 1
      %p166 = scmp.eq.s32.totalorder %s23, 1
      %p167 = scmp.ne.s32.totalorder %s162, %s164
      %p168 = scmp.eq.s32.totalorder %s23, 0
      %p169 = por %p167, %p168
      %p170 = scmp.ne.s32.totalorder %s162, %s164
      %p171 = scmp.eq.s32.totalorder %s28, 1
      %p172 = por %p170, %p171
      %p173 = scmp.ne.s32.totalorder %s164, %s165
      %p174 = scmp.eq.s32.totalorder %s28, 0
      %p175 = por %p173, %p174
      %p176 = scmp.ne.s32.totalorder %s164, %s165
      %p177 = scmp.eq.s32.totalorder %s29, 1
      %p178 = por %p176, %p177
      %p180 = scmp.ne.s32.totalorder %s165, %s179
      %p181 = scmp.eq.s32.totalorder %s29, 0
      %p182 = por %p180, %p181
      %s183 = ssub.s32 %s23, %s30
      %p184 = scmp.eq.s32.totalorder %s183, 0
      %s186 = sadd.s32 %s185, 1
      %s187 = scalar_select %p184, %s185, %s186
      %p190 = pneg %p184
      %p191 = scmp.eq.s32.totalorder %s23, 1
      %p192 = por %p190, %p191
      %p193 = scmp.ne.s32.totalorder %s185, %s188
      %p194 = scmp.eq.s32.totalorder %s23, 0
      %p195 = por %p193, %p194
      %p196 = scmp.ne.s32.totalorder %s185, %s188
      %p197 = scmp.eq.s32.totalorder %s28, 1
      %p198 = por %p196, %p197
      %p199 = scmp.ne.s32.totalorder %s188, %s189
      %p200 = scmp.eq.s32.totalorder %s28, 0
      %p201 = por %p199, %p200
      %p202 = scmp.ne.s32.totalorder %s188, %s189
      %p203 = scmp.eq.s32.totalorder %s29, 1
      %p204 = por %p202, %p203
      %p206 = scmp.ne.s32.totalorder %s189, %s205
      %p207 = scmp.eq.s32.totalorder %s29, 0
      %p208 = por %p206, %p207
      %s210 = sadd.s32 %s209, 1
      %p213 = scmp.eq.s32.totalorder %s23, 1
      %p214 = scmp.ne.s32.totalorder %s209, %s211
      %p215 = scmp.eq.s32.totalorder %s23, 0
      %p216 = por %p214, %p215
      %p217 = scmp.ne.s32.totalorder %s209, %s211
      %p218 = scmp.eq.s32.totalorder %s28, 1
      %p219 = por %p217, %p218
      %p220 = scmp.ne.s32.totalorder %s211, %s212
      %p221 = scmp.eq.s32.totalorder %s28, 0
      %p222 = por %p220, %p221
      %p223 = scmp.ne.s32.totalorder %s211, %s212
      %p224 = scmp.eq.s32.totalorder %s29, 1
      %p225 = por %p223, %p224
      %p227 = scmp.ne.s32.totalorder %s212, %s226
      %p228 = scmp.eq.s32.totalorder %s29, 0
      %p229 = por %p227, %p228
      %s230 = ssub.s32 %s23, %s30
      %p231 = scmp.eq.s32.totalorder %s230, 0
      %s233 = sadd.s32 %s232, 1
      %s234 = scalar_select %p231, %s232, %s233
      %p237 = pneg %p231
      %p238 = scmp.eq.s32.totalorder %s23, 1
      %p239 = por %p237, %p238
      %p240 = scmp.ne.s32.totalorder %s232, %s235
      %p241 = scmp.eq.s32.totalorder %s23, 0
      %p242 = por %p240, %p241
      %p243 = scmp.ne.s32.totalorder %s232, %s235
      %p244 = scmp.eq.s32.totalorder %s28, 1
      %p245 = por %p243, %p244
      %p246 = scmp.ne.s32.totalorder %s235, %s236
      %p247 = scmp.eq.s32.totalorder %s28, 0
      %p248 = por %p246, %p247
      %p249 = scmp.ne.s32.totalorder %s235, %s236
      %p250 = scmp.eq.s32.totalorder %s29, 1
      %p251 = por %p249, %p250
      %p253 = scmp.ne.s32.totalorder %s236, %s252
      %p254 = scmp.eq.s32.totalorder %s29, 0
      %p255 = por %p253, %p254
      %p256 = scmp.le.s32.totalorder 1, %s23
      %p257 = scmp.lt.s32.totalorder %s23, 3
      %p258 = pnand %p256, %p257
      %p259 = pneg %p258
      // Predicated region
      $region9: #{tpu_custom_call.1} parent=5 // pred_check
        _
      $region10: #{tpu_custom_call.1} parent=5 // pred_check_branch
        %261 = sbr.rel (%p258) target = $region12
      $region11: #{tpu_custom_call.1} parent=5 // pred_region
        %s262 = ssub.s32 %s23, 1
        // Predicated region
        $region13: #{tpu_custom_call.1} parent=11 // pred_check
          %p263 = pneg %p70
        $region14: #{tpu_custom_call.1} parent=11 // pred_check_branch
          %265 = sbr.rel (%p263) target = $region16
        $region15: #{tpu_custom_call.1} parent=11 // pred_region
          %s267 = ssub.s32 256, 256
          %268 = vsyncadd [#allocation6], %s267
          %s269 = sshll.u32 [#allocation5], 4
          %s270 = int_to_ptr.vmem [resolvable:$true] %s269
          %275 = dma.hbm_to_vmem [thread:$0]  %s1, 256, %s270, [#allocation6], 128, 128, 8
        $region16: #{tpu_custom_call.1} parent=11 // pred_fallthru
          _
        // Predicated region
        $region17: #{tpu_custom_call.1} parent=11 // pred_check
          %p276 = pneg %p91
        $region18: #{tpu_custom_call.1} parent=11 // pred_check_branch
          %278 = sbr.rel (%p276) target = $region20
        $region19: #{tpu_custom_call.1} parent=11 // pred_region
          _
        $region20: #{tpu_custom_call.1} parent=11 // pred_fallthru
          _
        // Predicated region
        $region21: #{tpu_custom_call.1} parent=11 // pred_check
          %p279 = pneg %p112
        $region22: #{tpu_custom_call.1} parent=11 // pred_check_branch
          %281 = sbr.rel (%p279) target = $region24
        $region23: #{tpu_custom_call.1} parent=11 // pred_region
          %s283 = ssub.s32 512, 512
          %284 = vsyncadd [#allocation6], %s283
          %s285 = sshll.u32 [#allocation7], 4
          %s286 = int_to_ptr.vmem [resolvable:$true] %s285
          %291 = dma.hbm_to_vmem [thread:$0]  %s3, 512, %s286, [#allocation6], 128, 128, 8
        $region24: #{tpu_custom_call.1} parent=11 // pred_fallthru
          _
        // Predicated region
        $region25: #{tpu_custom_call.1} parent=11 // pred_check
          %p292 = pneg %p133
        $region26: #{tpu_custom_call.1} parent=11 // pred_check_branch
          %294 = sbr.rel (%p292) target = $region28
        $region27: #{tpu_custom_call.1} parent=11 // pred_region
          _
        $region28: #{tpu_custom_call.1} parent=11 // pred_fallthru
          _
        // Predicated region
        $region29: #{tpu_custom_call.1} parent=11 // pred_check
          %p295 = pneg %p154
        $region30: #{tpu_custom_call.1} parent=11 // pred_check_branch
          %297 = sbr.rel (%p295) target = $region32
        $region31: #{tpu_custom_call.1} parent=11 // pred_region
          %s299 = ssub.s32 512, 512
          %300 = vsyncadd [#allocation9], %s299
          %s301 = sshll.u32 [#allocation8], 4
          %s302 = int_to_ptr.vmem [resolvable:$true] %s301
          %307 = dma.hbm_to_vmem [thread:$0]  %s5, 512, %s302, [#allocation9], 128, 128, 8
        $region32: #{tpu_custom_call.1} parent=11 // pred_fallthru
          _
        // Predicated region
        $region33: #{tpu_custom_call.1} parent=11 // pred_check
          %p308 = pneg %p175
        $region34: #{tpu_custom_call.1} parent=11 // pred_check_branch
          %310 = sbr.rel (%p308) target = $region36
        $region35: #{tpu_custom_call.1} parent=11 // pred_region
          _
        $region36: #{tpu_custom_call.1} parent=11 // pred_fallthru
          _
        // Predicated region
        $region37: #{tpu_custom_call.1} parent=11 // pred_check
          %p311 = pneg %p222
        $region38: #{tpu_custom_call.1} parent=11 // pred_check_branch
          %313 = sbr.rel (%p311) target = $region40
        $region39: #{tpu_custom_call.1} parent=11 // pred_region
          %s315 = ssub.s32 512, 512
          %316 = vsyncadd [#allocation6], %s315
          %s317 = sshll.u32 [#allocation11], 4
          %s318 = int_to_ptr.vmem [resolvable:$true] %s317
          %323 = dma.hbm_to_vmem [thread:$0]  %s8, 512, %s318, [#allocation6], 128, 128, 8
        $region40: #{tpu_custom_call.1} parent=11 // pred_fallthru
          _
      $region12: #{tpu_custom_call.1} parent=5 // pred_fallthru
        _
      %p324 = scmp.lt.s32.totalorder %s23, 2
      // Predicated region
      $region41: #{tpu_custom_call.1} parent=5 // pred_check
        %p325 = pneg %p324
      $region42: #{tpu_custom_call.1} parent=5 // pred_check_branch
        %327 = sbr.rel (%p325) target = $region44
      $region43: #{tpu_custom_call.1} parent=5 // pred_region
        // Predicated region
        $region45: #{tpu_custom_call.1} parent=43 // pred_check
          %p328 = pneg %p43
        $region46: #{tpu_custom_call.1} parent=43 // pred_check_branch
          %330 = sbr.rel (%p328) target = $region48
        $region47: #{tpu_custom_call.1} parent=43 // pred_region
          %s331 = sand.u32 %s23, 1
          %s332 = scalar_lea.sflag [#allocation3], %s331
          %s333 = sand.u32 %s33, 1
          %s334 = smul.addr %s333, 8
          %s335 = scalar_lea.vmem [#allocation2], %s334
          %s337 = ssub.s32 128, 128
          %338 = vsyncadd %s332, %s337
          %s339 = smul.addr %s23, 128
          %s340 = scalar_lea.hbm %s0, %s339
          %s342 = sshll.u32 %s335, 4
          %s343 = int_to_ptr.vmem [resolvable:$true] %s342
          %345 = dma.hbm_to_vmem [thread:$0]  %s340, 128, %s343, %s332
        $region48: #{tpu_custom_call.1} parent=43 // pred_fallthru
          _
        // Predicated region
        $region49: #{tpu_custom_call.1} parent=43 // pred_check
          %p346 = pneg %p195
        $region50: #{tpu_custom_call.1} parent=43 // pred_check_branch
          %348 = sbr.rel (%p346) target = $region52
        $region51: #{tpu_custom_call.1} parent=43 // pred_region
          %s349 = sand.u32 %s23, 1
          %s350 = scalar_lea.sflag [#allocation3], %s349
          %s351 = sand.u32 %s185, 1
          %s352 = smul.addr %s351, 8
          %s353 = scalar_lea.vmem [#allocation10], %s352
          %s355 = ssub.s32 128, 128
          %356 = vsyncadd %s350, %s355
          %s357 = smul.addr %s23, 128
          %s358 = scalar_lea.hbm %s7, %s357
          %s360 = sshll.u32 %s353, 4
          %s361 = int_to_ptr.vmem [resolvable:$true] %s360
          %363 = dma.hbm_to_vmem [thread:$0]  %s358, 128, %s361, %s350
        $region52: #{tpu_custom_call.1} parent=43 // pred_fallthru
          _
      $region44: #{tpu_custom_call.1} parent=5 // pred_fallthru
        _
      %p364 = scmp.le.s32.totalorder 1, %s23
      %p365 = scmp.lt.s32.totalorder %s23, 3
      %p366 = pnand %p364, %p365
      %p367 = pneg %p366
      // Predicated region
      $region53: #{tpu_custom_call.1} parent=5 // pred_check
        _
      $region54: #{tpu_custom_call.1} parent=5 // pred_check_branch
        %369 = sbr.rel (%p366) target = $region56
      $region55: #{tpu_custom_call.1} parent=5 // pred_region
        %s370 = ssub.s32 %s23, 1
        %s371 = sand.u32 %s28, 1
        %s372 = scalar_lea.sflag [#allocation3], %s371
        %s373 = sand.u32 %s36, 1
        %s374 = smul.addr %s373, 8
        %s375 = scalar_lea.vmem [#allocation2], %s374
        // Predicated region
        $region57: #{tpu_custom_call.1} parent=55 // pred_check
          %p376 = pneg %p49
        $region58: #{tpu_custom_call.1} parent=55 // pred_check_branch
          %378 = sbr.rel (%p376) target = $region60
        $region59: #{tpu_custom_call.1} parent=55 // pred_region
          %379 = dma.done %s372, 128
        $region60: #{tpu_custom_call.1} parent=55 // pred_fallthru
          _
        // Predicated region
        $region61: #{tpu_custom_call.1} parent=55 // pred_check
          %p380 = pneg %p70
        $region62: #{tpu_custom_call.1} parent=55 // pred_check_branch
          %382 = sbr.rel (%p380) target = $region64
        $region63: #{tpu_custom_call.1} parent=55 // pred_region
          %383 = dma.done [#allocation6], 256
        $region64: #{tpu_custom_call.1} parent=55 // pred_fallthru
          _
        // Predicated region
        $region65: #{tpu_custom_call.1} parent=55 // pred_check
          %p384 = pneg %p112
        $region66: #{tpu_custom_call.1} parent=55 // pred_check_branch
          %386 = sbr.rel (%p384) target = $region68
        $region67: #{tpu_custom_call.1} parent=55 // pred_region
          %387 = dma.done [#allocation6], 512
        $region68: #{tpu_custom_call.1} parent=55 // pred_fallthru
          _
        // Predicated region
        $region69: #{tpu_custom_call.1} parent=55 // pred_check
          %p388 = pneg %p154
        $region70: #{tpu_custom_call.1} parent=55 // pred_check_branch
          %390 = sbr.rel (%p388) target = $region72
        $region71: #{tpu_custom_call.1} parent=55 // pred_region
          %391 = dma.done [#allocation9], 512
        $region72: #{tpu_custom_call.1} parent=55 // pred_fallthru
          _
        %s392 = sand.u32 %s28, 1
        %s393 = scalar_lea.sflag [#allocation3], %s392
        %s394 = sand.u32 %s188, 1
        %s395 = smul.addr %s394, 8
        %s396 = scalar_lea.vmem [#allocation10], %s395
        // Predicated region
        $region73: #{tpu_custom_call.1} parent=55 // pred_check
          %p397 = pneg %p201
        $region74: #{tpu_custom_call.1} parent=55 // pred_check_branch
          %399 = sbr.rel (%p397) target = $region76
        $region75: #{tpu_custom_call.1} parent=55 // pred_region
          %400 = dma.done %s393, 128
        $region76: #{tpu_custom_call.1} parent=55 // pred_fallthru
          _
        // Predicated region
        $region77: #{tpu_custom_call.1} parent=55 // pred_check
          %p401 = pneg %p222
        $region78: #{tpu_custom_call.1} parent=55 // pred_check_branch
          %403 = sbr.rel (%p401) target = $region80
        $region79: #{tpu_custom_call.1} parent=55 // pred_region
          %404 = dma.done [#allocation6], 512
        $region80: #{tpu_custom_call.1} parent=55 // pred_fallthru
          _
        %s405 = sand.u32 %s28, 1
        %s406 = scalar_lea.sflag [#allocation3], %s405
        %s407 = sand.u32 %s36, 1
        %s408 = smul.addr %s407, 8
        %s409 = scalar_lea.vmem [#allocation2], %s408
        %p410 = pneg %p49
        %p411 = pneg %p46
        %p412 = pneg %p70
        %p413 = pneg %p67
        %p414 = pneg %p91
        %p415 = pneg %p88
        %p416 = pneg %p112
        %p417 = pneg %p109
        %p418 = pneg %p133
        %p419 = pneg %p130
        %p420 = pneg %p154
        %p421 = pneg %p151
        %p422 = pneg %p175
        %p423 = pneg %p172
        %s424 = sand.u32 %s28, 1
        %s425 = scalar_lea.sflag [#allocation3], %s424
        %s426 = sand.u32 %s188, 1
        %s427 = smul.addr %s426, 8
        %s428 = scalar_lea.vmem [#allocation10], %s427
        %p429 = pneg %p201
        %p430 = pneg %p198
        %p431 = pneg %p222
        %p432 = pneg %p219
        %p433 = pneg %p248
        %p434 = pneg %p245
        %s435 = sand.u32 %s235, 1
        %s436 = scalar_lea.sflag [#allocation4], %s435
        %s437 = sand.u32 %s235, 1
        %s438 = smul.addr %s437, 8
        %s439 = scalar_lea.vmem [#allocation12], %s438
        %v440 = vld [vmem:[%s375] sm:$0xff]
        %v441 = vld [vmem:[#allocation5] sm:$0xff]
        %v442 = vld [vmem:[#allocation5 + $0x8] sm:$0xff]
        %v443 = vld [vmem:[%s2] sm:$0x1]
        %v445 = vlaneseq
        %v446 = vshrl.u32 %v445, 7
        %v447 = vsub.s32 0, %v446
        %v448 = vrot.slane %v443, %v447
        %vm450 = vcmask 130048
        %v452 = vsel %vm450, %v440, 0
        %454 = vmatprep.subr.mxu0 0.0
        %455 = vmatpush1.msra.mxu0 0.0
        %456 = vmatprep.subr.mxu0 0.0
        %457 = vmatpush1.msra.mxu0 0.0
        %458 = vmatprep.subr.mxu0 0.0
        %459 = vmatpush1.msra.mxu0 0.0
        %460 = vmatprep.subr.mxu0 0.0
        %461 = vmatpush1.msra.mxu0 0.0
        %462 = vmatprep.subr.mxu0 0.0
        %463 = vmatpush1.msra.mxu0 0.0
        %464 = vmatprep.subr.mxu0 0.0
        %465 = vmatpush1.msra.mxu0 0.0
        %466 = vmatprep.subr.mxu0 0.0
        %467 = vmatpush1.msra.mxu0 0.0
        %468 = vmatprep.subr.mxu0 0.0
        %469 = vmatpush1.msra.mxu0 0.0
        %470 = vmatprep.subr.mxu0 0.0
        %471 = vmatpush1.msra.mxu0 0.0
        %472 = vmatprep.subr.mxu0 0.0
        %473 = vmatpush1.msra.mxu0 0.0
        %474 = vmatprep.subr.mxu0 0.0
        %475 = vmatpush1.msra.mxu0 0.0
        %476 = vmatprep.subr.mxu0 0.0
        %477 = vmatpush1.msra.mxu0 0.0
        %478 = vmatprep.subr.mxu0 0.0
        %479 = vmatpush1.msra.mxu0 0.0
        %480 = vmatprep.subr.mxu0 0.0
        %481 = vmatpush1.msra.mxu0 0.0
        %482 = vmatprep.subr.mxu0 0.0
        %483 = vmatpush1.msra.mxu0 %v442
        %484 = vmatprep.subr.mxu0 0.0
        %485 = vmatpush1.msra.mxu0 %v441
        %486 = vmatprep.subr.mxu0 0.0
        %487 = vmatpush2.msra.mxu0 0.0
        %488 = vmatprep.subr.mxu0 0.0
        %489 = vmatpush2.msra.mxu0 0.0
        %490 = vmatprep.subr.mxu0 0.0
        %491 = vmatpush2.msra.mxu0 0.0
        %492 = vmatprep.subr.mxu0 0.0
        %493 = vmatpush2.msra.mxu0 0.0
        %494 = vmatprep.subr.mxu0 0.0
        %495 = vmatpush2.msra.mxu0 0.0
        %496 = vmatprep.subr.mxu0 0.0
        %497 = vmatpush2.msra.mxu0 0.0
        %498 = vmatprep.subr.mxu0 0.0
        %499 = vmatpush2.msra.mxu0 0.0
        %500 = vmatprep.subr.mxu0 0.0
        %501 = vmatpush2.msra.mxu0 0.0
        %502 = vmatprep.subr.mxu0 0.0
        %503 = vmatpush2.msra.mxu0 0.0
        %504 = vmatprep.subr.mxu0 0.0
        %505 = vmatpush2.msra.mxu0 0.0
        %506 = vmatprep.subr.mxu0 0.0
        %507 = vmatpush2.msra.mxu0 0.0
        %508 = vmatprep.subr.mxu0 0.0
        %509 = vmatpush2.msra.mxu0 0.0
        %510 = vmatprep.subr.mxu0 0.0
        %511 = vmatpush2.msra.mxu0 0.0
        %512 = vmatprep.subr.mxu0 0.0
        %513 = vmatpush2.msra.mxu0 0.0
        %514 = vmatprep.subr.mxu0 0.0
        %515 = vmatpush2.msra.mxu0 0.0
        %516 = vmatprep.subr.mxu0 0.0
        %517 = vmatpush2.msra.mxu0 0.0
        %518 = vmatprep.mubr.f32.mxu0 0.0
        %519 = vmatmul.mubr.f32.gmra.mxu0 %v452
        %v520 = vpop.f32.mrf.mxu0
        %v521 = vadd.f32 %v448, %v520
        %v522 = vpop.f32.mrf.mxu0
        %523 = vdwg.mxu0
        %vm524 = vcmask 261120
        %v525 = vsel %vm524, %v521, 0.0
        %v526 = vrot.slane %v525, 4
        %v527 = vadd.f32 %v525, %v526
        %v528 = vrot.slane %v527, 2
        %v529 = vadd.f32 %v527, %v528
        %v530 = vrot.slane %v529, 1
        %v531 = vadd.f32 %v529, %v530
        %v532 = vrcp.pop 8.0
        %v533 = vmul.f32 %v531, %v532
        %v534 = vmul.f32 %v521, %v521
        %v535 = vsel %vm524, %v534, 0.0
        %v536 = vrot.slane %v535, 4
        %v537 = vadd.f32 %v535, %v536
        %v538 = vrot.slane %v537, 2
        %v539 = vadd.f32 %v537, %v538
        %v540 = vrot.slane %v539, 1
        %v541 = vadd.f32 %v539, %v540
        %v542 = vmul.f32 %v541, %v532
        %v543 = vmul.f32 %v533, %v533
        %v544 = vsub.f32 %v542, %v543
        %v545 = vsub.f32 %v521, %v533
        %v546 = vadd.f32 %v544, 1e-05
        %v547 = vrsqrt.pop %v546
        %v548 = vmul.f32 %v545, %v547
        %v549 = vmax.f32 %v548, 0.0
        %v550 = vld [vmem:[#allocation7] sm:$0xff]
        %v551 = vld [vmem:[#allocation7 + $0x8] sm:$0xff]
        %v552 = vld [vmem:[#allocation7 + $0x10] sm:$0xff]
        %v553 = vld [vmem:[#allocation7 + $0x18] sm:$0xff]
        %v554 = vld [vmem:[%s4] sm:$0x1]
        %v556 = vlaneseq
        %v557 = vshrl.u32 %v556, 7
        %v558 = vsub.s32 0, %v557
        %v559 = vrot.slane %v554, %v558
        %v562 = vsel %vm524, %v549, 0
        %564 = vmatprep.subr.mxu0 0.0
        %565 = vmatpush1.msra.mxu0 0.0
        %566 = vmatprep.subr.mxu0 0.0
        %567 = vmatpush1.msra.mxu0 0.0
        %568 = vmatprep.subr.mxu0 0.0
        %569 = vmatpush1.msra.mxu0 0.0
        %570 = vmatprep.subr.mxu0 0.0
        %571 = vmatpush1.msra.mxu0 0.0
        %572 = vmatprep.subr.mxu0 0.0
        %573 = vmatpush1.msra.mxu0 0.0
        %574 = vmatprep.subr.mxu0 0.0
        %575 = vmatpush1.msra.mxu0 0.0
        %576 = vmatprep.subr.mxu0 0.0
        %577 = vmatpush1.msra.mxu0 0.0
        %578 = vmatprep.subr.mxu0 0.0
        %579 = vmatpush1.msra.mxu0 0.0
        %580 = vmatprep.subr.mxu0 0.0
        %581 = vmatpush1.msra.mxu0 0.0
        %582 = vmatprep.subr.mxu0 0.0
        %583 = vmatpush1.msra.mxu0 0.0
        %584 = vmatprep.subr.mxu0 0.0
        %585 = vmatpush1.msra.mxu0 0.0
        %586 = vmatprep.subr.mxu0 0.0
        %587 = vmatpush1.msra.mxu0 0.0
        %588 = vmatprep.subr.mxu0 0.0
        %589 = vmatpush1.msra.mxu0 %v553
        %590 = vmatprep.subr.mxu0 0.0
        %591 = vmatpush1.msra.mxu0 %v552
        %592 = vmatprep.subr.mxu0 0.0
        %593 = vmatpush1.msra.mxu0 %v551
        %594 = vmatprep.subr.mxu0 0.0
        %595 = vmatpush1.msra.mxu0 %v550
        %596 = vmatprep.subr.mxu0 0.0
        %597 = vmatpush2.msra.mxu0 0.0
        %598 = vmatprep.subr.mxu0 0.0
        %599 = vmatpush2.msra.mxu0 0.0
        %600 = vmatprep.subr.mxu0 0.0
        %601 = vmatpush2.msra.mxu0 0.0
        %602 = vmatprep.subr.mxu0 0.0
        %603 = vmatpush2.msra.mxu0 0.0
        %604 = vmatprep.subr.mxu0 0.0
        %605 = vmatpush2.msra.mxu0 0.0
        %606 = vmatprep.subr.mxu0 0.0
        %607 = vmatpush2.msra.mxu0 0.0
        %608 = vmatprep.subr.mxu0 0.0
        %609 = vmatpush2.msra.mxu0 0.0
        %610 = vmatprep.subr.mxu0 0.0
        %611 = vmatpush2.msra.mxu0 0.0
        %612 = vmatprep.subr.mxu0 0.0
        %613 = vmatpush2.msra.mxu0 0.0
        %614 = vmatprep.subr.mxu0 0.0
        %615 = vmatpush2.msra.mxu0 0.0
        %616 = vmatprep.subr.mxu0 0.0
        %617 = vmatpush2.msra.mxu0 0.0
        %618 = vmatprep.subr.mxu0 0.0
        %619 = vmatpush2.msra.mxu0 0.0
        %620 = vmatprep.subr.mxu0 0.0
        %621 = vmatpush2.msra.mxu0 0.0
        %622 = vmatprep.subr.mxu0 0.0
        %623 = vmatpush2.msra.mxu0 0.0
        %624 = vmatprep.subr.mxu0 0.0
        %625 = vmatpush2.msra.mxu0 0.0
        %626 = vmatprep.subr.mxu0 0.0
        %627 = vmatpush2.msra.mxu0 0.0
        %628 = vmatprep.mubr.f32.mxu0 0.0
        %629 = vmatmul.mubr.f32.gmra.mxu0 %v562
        %v630 = vpop.f32.mrf.mxu0
        %v631 = vadd.f32 %v559, %v630
        %v632 = vpop.f32.mrf.mxu0
        %633 = vdwg.mxu0
        %v634 = vsel %vm524, %v631, 0.0
        %v635 = vrot.slane %v634, 4
        %v636 = vadd.f32 %v634, %v635
        %v637 = vrot.slane %v636, 2
        %v638 = vadd.f32 %v636, %v637
        %v639 = vrot.slane %v638, 1
        %v640 = vadd.f32 %v638, %v639
        %v641 = vmul.f32 %v640, %v532
        %v642 = vmul.f32 %v631, %v631
        %v643 = vsel %vm524, %v642, 0.0
        %v644 = vrot.slane %v643, 4
        %v645 = vadd.f32 %v643, %v644
        %v646 = vrot.slane %v645, 2
        %v647 = vadd.f32 %v645, %v646
        %v648 = vrot.slane %v647, 1
        %v649 = vadd.f32 %v647, %v648
        %v650 = vmul.f32 %v649, %v532
        %v651 = vmul.f32 %v641, %v641
        %v652 = vsub.f32 %v650, %v651
        %v653 = vsub.f32 %v631, %v641
        %v654 = vadd.f32 %v652, 1e-05
        %v655 = vrsqrt.pop %v654
        %v656 = vmul.f32 %v653, %v655
        %v657 = vmax.f32 %v656, 0.0
        %v658 = vld [vmem:[#allocation8] sm:$0xff]
        %v659 = vld [vmem:[#allocation8 + $0x8] sm:$0xff]
        %v660 = vld [vmem:[#allocation8 + $0x10] sm:$0xff]
        %v661 = vld [vmem:[#allocation8 + $0x18] sm:$0xff]
        %v662 = vld [vmem:[%s6] sm:$0x1]
        %v664 = vlaneseq
        %v665 = vshrl.u32 %v664, 7
        %v666 = vsub.s32 0, %v665
        %v667 = vrot.slane %v662, %v666
        %v670 = vsel %vm524, %v657, 0
        %672 = vmatprep.subr.mxu0 0.0
        %673 = vmatpush1.msra.mxu0 0.0
        %674 = vmatprep.subr.mxu0 0.0
        %675 = vmatpush1.msra.mxu0 0.0
        %676 = vmatprep.subr.mxu0 0.0
        %677 = vmatpush1.msra.mxu0 0.0
        %678 = vmatprep.subr.mxu0 0.0
        %679 = vmatpush1.msra.mxu0 0.0
        %680 = vmatprep.subr.mxu0 0.0
        %681 = vmatpush1.msra.mxu0 0.0
        %682 = vmatprep.subr.mxu0 0.0
        %683 = vmatpush1.msra.mxu0 0.0
        %684 = vmatprep.subr.mxu0 0.0
        %685 = vmatpush1.msra.mxu0 0.0
        %686 = vmatprep.subr.mxu0 0.0
        %687 = vmatpush1.msra.mxu0 0.0
        %688 = vmatprep.subr.mxu0 0.0
        %689 = vmatpush1.msra.mxu0 0.0
        %690 = vmatprep.subr.mxu0 0.0
        %691 = vmatpush1.msra.mxu0 0.0
        %692 = vmatprep.subr.mxu0 0.0
        %693 = vmatpush1.msra.mxu0 0.0
        %694 = vmatprep.subr.mxu0 0.0
        %695 = vmatpush1.msra.mxu0 0.0
        %696 = vmatprep.subr.mxu0 0.0
        %697 = vmatpush1.msra.mxu0 %v661
        %698 = vmatprep.subr.mxu0 0.0
        %699 = vmatpush1.msra.mxu0 %v660
        %700 = vmatprep.subr.mxu0 0.0
        %701 = vmatpush1.msra.mxu0 %v659
        %702 = vmatprep.subr.mxu0 0.0
        %703 = vmatpush1.msra.mxu0 %v658
        %704 = vmatprep.subr.mxu0 0.0
        %705 = vmatpush2.msra.mxu0 0.0
        %706 = vmatprep.subr.mxu0 0.0
        %707 = vmatpush2.msra.mxu0 0.0
        %708 = vmatprep.subr.mxu0 0.0
        %709 = vmatpush2.msra.mxu0 0.0
        %710 = vmatprep.subr.mxu0 0.0
        %711 = vmatpush2.msra.mxu0 0.0
        %712 = vmatprep.subr.mxu0 0.0
        %713 = vmatpush2.msra.mxu0 0.0
        %714 = vmatprep.subr.mxu0 0.0
        %715 = vmatpush2.msra.mxu0 0.0
        %716 = vmatprep.subr.mxu0 0.0
        %717 = vmatpush2.msra.mxu0 0.0
        %718 = vmatprep.subr.mxu0 0.0
        %719 = vmatpush2.msra.mxu0 0.0
        %720 = vmatprep.subr.mxu0 0.0
        %721 = vmatpush2.msra.mxu0 0.0
        %722 = vmatprep.subr.mxu0 0.0
        %723 = vmatpush2.msra.mxu0 0.0
        %724 = vmatprep.subr.mxu0 0.0
        %725 = vmatpush2.msra.mxu0 0.0
        %726 = vmatprep.subr.mxu0 0.0
        %727 = vmatpush2.msra.mxu0 0.0
        %728 = vmatprep.subr.mxu0 0.0
        %729 = vmatpush2.msra.mxu0 0.0
        %730 = vmatprep.subr.mxu0 0.0
        %731 = vmatpush2.msra.mxu0 0.0
        %732 = vmatprep.subr.mxu0 0.0
        %733 = vmatpush2.msra.mxu0 0.0
        %734 = vmatprep.subr.mxu0 0.0
        %735 = vmatpush2.msra.mxu0 0.0
        %736 = vmatprep.mubr.f32.mxu0 0.0
        %737 = vmatmul.mubr.f32.gmra.mxu0 %v670
        %v738 = vpop.f32.mrf.mxu0
        %v739 = vadd.f32 %v667, %v738
        %v740 = vpop.f32.mrf.mxu0
        %741 = vdwg.mxu0
        %v742 = vld [vmem:[%s396] sm:$0xff]
        %v743 = vadd.f32 %v739, %v742
        %vm744 = vcmp.ge.f32.partialorder %v743, 0.0
        %v745 = vsel %vm744, 1, 0
        %v746 = vcvt.s32.f32 %v745
        %v747 = vld [vmem:[#allocation11] sm:$0xff]
        %v748 = vld [vmem:[#allocation11 + $0x8] sm:$0xff]
        %v749 = vld [vmem:[#allocation11 + $0x10] sm:$0xff]
        %v750 = vld [vmem:[#allocation11 + $0x18] sm:$0xf]
        %vm751 = vcmask 228352
        %v753 = vsel %vm751, %v746, 0
        %vm755 = vcmask 1043456
        %v757 = vsel %vm755, %v750, 0
        %759 = vmatprep.subr.mxu0 0.0
        %760 = vmatpush1.msra.mxu0 0.0
        %761 = vmatprep.subr.mxu0 0.0
        %762 = vmatpush1.msra.mxu0 0.0
        %763 = vmatprep.subr.mxu0 0.0
        %764 = vmatpush1.msra.mxu0 0.0
        %765 = vmatprep.subr.mxu0 0.0
        %766 = vmatpush1.msra.mxu0 0.0
        %767 = vmatprep.subr.mxu0 0.0
        %768 = vmatpush1.msra.mxu0 0.0
        %769 = vmatprep.subr.mxu0 0.0
        %770 = vmatpush1.msra.mxu0 0.0
        %771 = vmatprep.subr.mxu0 0.0
        %772 = vmatpush1.msra.mxu0 0.0
        %773 = vmatprep.subr.mxu0 0.0
        %774 = vmatpush1.msra.mxu0 0.0
        %775 = vmatprep.subr.mxu0 0.0
        %776 = vmatpush1.msra.mxu0 0.0
        %777 = vmatprep.subr.mxu0 0.0
        %778 = vmatpush1.msra.mxu0 0.0
        %779 = vmatprep.subr.mxu0 0.0
        %780 = vmatpush1.msra.mxu0 0.0
        %781 = vmatprep.subr.mxu0 0.0
        %782 = vmatpush1.msra.mxu0 0.0
        %783 = vmatprep.subr.mxu0 0.0
        %784 = vmatpush1.msra.mxu0 %v757
        %785 = vmatprep.subr.mxu0 0.0
        %786 = vmatpush1.msra.mxu0 %v749
        %787 = vmatprep.subr.mxu0 0.0
        %788 = vmatpush1.msra.mxu0 %v748
        %789 = vmatprep.subr.mxu0 0.0
        %790 = vmatpush1.msra.mxu0 %v747
        %791 = vmatprep.subr.mxu0 0.0
        %792 = vmatpush2.msra.mxu0 0.0
        %793 = vmatprep.subr.mxu0 0.0
        %794 = vmatpush2.msra.mxu0 0.0
        %795 = vmatprep.subr.mxu0 0.0
        %796 = vmatpush2.msra.mxu0 0.0
        %797 = vmatprep.subr.mxu0 0.0
        %798 = vmatpush2.msra.mxu0 0.0
        %799 = vmatprep.subr.mxu0 0.0
        %800 = vmatpush2.msra.mxu0 0.0
        %801 = vmatprep.subr.mxu0 0.0
        %802 = vmatpush2.msra.mxu0 0.0
        %803 = vmatprep.subr.mxu0 0.0
        %804 = vmatpush2.msra.mxu0 0.0
        %805 = vmatprep.subr.mxu0 0.0
        %806 = vmatpush2.msra.mxu0 0.0
        %807 = vmatprep.subr.mxu0 0.0
        %808 = vmatpush2.msra.mxu0 0.0
        %809 = vmatprep.subr.mxu0 0.0
        %810 = vmatpush2.msra.mxu0 0.0
        %811 = vmatprep.subr.mxu0 0.0
        %812 = vmatpush2.msra.mxu0 0.0
        %813 = vmatprep.subr.mxu0 0.0
        %814 = vmatpush2.msra.mxu0 0.0
        %815 = vmatprep.subr.mxu0 0.0
        %816 = vmatpush2.msra.mxu0 0.0
        %817 = vmatprep.subr.mxu0 0.0
        %818 = vmatpush2.msra.mxu0 0.0
        %819 = vmatprep.subr.mxu0 0.0
        %820 = vmatpush2.msra.mxu0 0.0
        %821 = vmatprep.subr.mxu0 0.0
        %822 = vmatpush2.msra.mxu0 0.0
        %823 = vmatprep.mubr.f32.mxu0 0.0
        %824 = vmatmul.mubr.f32.gmra.mxu0 %v753
        %v825 = vpop.f32.mrf.mxu0
        %v826 = vadd.f32 0.0, %v825
        %v827 = vpop.f32.mrf.mxu0
        %828 = vdwg.mxu0
        %829 = vst [vmem:[%s439] sm:$0xff] %v826
        %s830 = sand.u32 %s235, 1
        %s831 = scalar_lea.sflag [#allocation4], %s830
        %s832 = sand.u32 %s235, 1
        %s833 = smul.addr %s832, 8
        %s834 = scalar_lea.vmem [#allocation12], %s833
        // Predicated region
        $region81: #{tpu_custom_call.1} parent=55 // pred_check
          %p835 = pneg %p245
        $region82: #{tpu_custom_call.1} parent=55 // pred_check_branch
          %837 = sbr.rel (%p835) target = $region84
        $region83: #{tpu_custom_call.1} parent=55 // pred_region
          %s839 = ssub.s32 128, 128
          %840 = vsyncadd %s831, %s839
          %s841 = smul.addr %s28, 128
          %s842 = scalar_lea.hbm %s9, %s841
          %s844 = sshll.u32 %s834, 4
          %s845 = int_to_ptr.vmem [resolvable:$true] %s844
          %847 = dma.vmem_to_hbm [thread:$0]  %s845, 128, %s842, %s831
        $region84: #{tpu_custom_call.1} parent=55 // pred_fallthru
          _
      $region56: #{tpu_custom_call.1} parent=5 // pred_fallthru
        _
      %p848 = scmp.le.s32.totalorder 2, %s23
      // Predicated region
      $region85: #{tpu_custom_call.1} parent=5 // pred_check
        %p849 = pneg %p848
      $region86: #{tpu_custom_call.1} parent=5 // pred_check_branch
        %851 = sbr.rel (%p849) target = $region88
      $region87: #{tpu_custom_call.1} parent=5 // pred_region
        %s852 = ssub.s32 %s23, 2
        // Predicated region
        $region89: #{tpu_custom_call.1} parent=87 // pred_check
          %p853 = pneg %p251
        $region90: #{tpu_custom_call.1} parent=87 // pred_check_branch
          %855 = sbr.rel (%p853) target = $region92
        $region91: #{tpu_custom_call.1} parent=87 // pred_region
          %s856 = sand.u32 %s236, 1
          %s857 = scalar_lea.sflag [#allocation4], %s856
          %s858 = sand.u32 %s236, 1
          %s859 = smul.addr %s858, 8
          %s860 = scalar_lea.vmem [#allocation12], %s859
          %861 = dma.done %s857, 128
        $region92: #{tpu_custom_call.1} parent=87 // pred_fallthru
          _
      $region88: #{tpu_custom_call.1} parent=5 // pred_fallthru
        _
    $region6: #{tpu_custom_call.1} parent=1 // loop_footer
      %s27 = sadd.s32 1, %s23
    $region7: #{tpu_custom_call.1} parent=1 // loop_footer_branch
      %22 = sbr.rel target = $region3
    $region8: #{tpu_custom_call.1} parent=1 // loop_exit
      _
    %862 = vsyncpa [#allocation3], 1
    %s863 = scalar_lea.sflag [#allocation3], 1
    %864 = vsyncpa %s863, 1
    %865 = vsyncpa [#allocation6], 1
    %866 = vsyncpa [#allocation9], 1
    %867 = vsyncpa [#allocation4], 1
    %s868 = scalar_lea.sflag [#allocation4], 1
    %869 = vsyncpa %s868, 1

</llo_original>
